<compile_context>
chip_gen: v5e
topology: v5e:2x2
jax: 0.10.0
libtpu: 0.0.40
codegen_flags: <defaults>
</compile_context>

<pallas_src>
import jax
import jax.numpy as jnp
from jax.experimental import pallas as pl
from jax.experimental.pallas import tpu as pltpu


# --------------------------------------------------------------------------- #
# Kernel
# --------------------------------------------------------------------------- #
def moe_kernel(coef_sm, x_ref, wT_ref, awT_ref, b_ref, out_ref, wc_ref):
    """Grid = (D_out tiles [parallel], experts [arbitrary / reduction]).

    coef_sm : SMEM (E, 1+A) f32   [g_e, g_e*adapt_0, ..., g_e*adapt_{A-1}]
    x_ref   : (B, D)              activations (resident across the grid)
    wT_ref  : (1, 1, D, tn)       (W_e + adapt_bias_e)^T, block-contiguous tile
    awT_ref : (1, 1, A, D, tn)    adaptive-weight^T tiles
    b_ref   : (1, tn)             gate-combined bias tile (f32)
    wc_ref  : (D, tn) f32 scratch accumulator for the gated combined weight.
    """
    e = pl.program_id(1)

    @pl.when(e == 0)
    def _():
        wc_ref[...] = jnp.zeros_like(wc_ref)

    g = coef_sm[e, 0]                                        # gate_e (SMEM scalar)

    # Gate-weighted (base + folded adaptive-bias) weight tile.
    acc = g * wT_ref[0, 0].astype(jnp.float32)               # (D, tn)

    # Contraction over adapt_dim with precomputed g_e*adapt_a scalar coefficients
    # (SMEM). A is small -> static unroll; 1 MAC per streamed element, well under
    # the HBM feed rate.
    num_a = awT_ref.shape[2]
    for a in range(num_a):
        acc = acc + coef_sm[e, 1 + a] * awT_ref[0, 0, a].astype(jnp.float32)

    wc_ref[...] = wc_ref[...] + acc

    # Single MXU matmul per output tile once all experts are folded in.
    # (out_specs index_map is constant in e, so writeback happens on n change.)
    @pl.when(e == pl.num_programs(1) - 1)
    def _():
        w = wc_ref[...].astype(x_ref.dtype)                  # bf16 MXU operands
        y = jnp.dot(x_ref[...], w, preferred_element_type=jnp.float32)
        out_ref[...] = (y + b_ref[...]).astype(out_ref.dtype)


# --------------------------------------------------------------------------- #
# One-time parameter preparation (layout plumbing hoisted out of the call path)
# --------------------------------------------------------------------------- #
def _select_tile(D, A, weight_dtype, vmem_budget_bytes):
    """Largest lane-dense D_out tile whose double-buffered stream fits VMEM."""
    dsz = jnp.dtype(weight_dtype).itemsize

    def fits(tn):
        # 2x double-buffered streamed weights (base + A adaptive slabs) + f32 scratch
        return 2 * (A + 1) * D * tn * dsz + 4 * D * tn <= vmem_budget_bytes

    # Prefer multiples of 128 (unmasked vst) with nt >= 2 so both v7x
    # TensorCores get a share of the parallel axis.
    for tn in (512, 256, 128):
        if D % tn == 0 and D // tn >= 2 and fits(tn):
            return tn
    return D  # small D: single full-width tile


def prepare_moe_params(params, *, weight_dtype=jnp.bfloat16, tn=None,
                       vmem_budget_bytes=40 * 1024 * 1024):
    """Run ONCE per parameter set: transpose, fold adapt_b, cast, pre-tile."""
    base_w = params["base_w"]       # (E, D, D)   torch layout [out, in]
    base_b = params["base_b"]       # (E, D)
    adapt_w = params["adapt_w"]     # (E, D*D, A) torch nn.Linear weight layout
    adapt_b = params["adapt_b"]     # (E, D*D)
    E, D, _ = base_w.shape
    A = adapt_w.shape[-1]

    if tn is None:
        tn = _select_tile(D, A, weight_dtype, vmem_budget_bytes)
    assert D % tn == 0, "D must be divisible by the D_out tile size"
    nt = D // tn

    # W_comb^T base part: (W + adapt_bias)^T   (adapt_b is adapt_input independent)
    wT = jnp.transpose(base_w, (0, 2, 1))                              # (E, D, D)
    abT = jnp.transpose(adapt_b.reshape(E, D, D), (0, 2, 1))           # (E, D, D)
    wT_comb = (wT + abT).astype(weight_dtype)
    # block-contiguous pre-tiling: (E, nt, D_in, tn)
    wT_comb = wT_comb.reshape(E, D, nt, tn).transpose(0, 2, 1, 3)

    # adaptive weights: (E, D_out, D_in, A) -> (E, A, D_in, D_out) -> tiled
    awT = jnp.transpose(adapt_w.reshape(E, D, D, A), (0, 3, 2, 1)).astype(weight_dtype)
    awT = awT.reshape(E, A, D, nt, tn).transpose(0, 3, 1, 2, 4)        # (E, nt, A, D, tn)

    return dict(
        wT_comb=jax.block_until_ready(wT_comb),
        awT=jax.block_until_ready(awT),
        base_b=params["base_b"].astype(jnp.float32),
        gate_w=params["gate_w"].astype(jnp.float32),
        gate_b=params["gate_b"].astype(jnp.float32),
        weight_dtype=weight_dtype, tn=tn, nt=nt, E=E, D=D, A=A,
    )


# --------------------------------------------------------------------------- #
# Forward
# --------------------------------------------------------------------------- #
def mixture_of_experts(x, adapt_input, prepped):
    wT_comb, awT = prepped["wT_comb"], prepped["awT"]
    E, D, A = prepped["E"], prepped["D"], prepped["A"]
    tn, nt = prepped["tn"], prepped["nt"]
    wdt = prepped["weight_dtype"]
    B = x.shape[0]

    x = x.astype(wdt)

    # Gating softmax + per-expert scalar coefficients (hoisted out of the kernel):
    # coef[e] = [g_e, g_e*adapt_0, ..., g_e*adapt_{A-1}]
    adapt_f32 = adapt_input.astype(jnp.float32)
    gate = jax.nn.softmax(adapt_f32 @ prepped["gate_w"].T + prepped["gate_b"],
                          axis=-1)                                     # (1, E)
    coef = jnp.concatenate([gate.T, gate.T * adapt_f32], axis=1)       # (E, 1+A)
    coef = coef.astype(jnp.float32)

    # Gate-combined bias, computed once in the wrapper.
    b_comb = (gate @ prepped["base_b"]).astype(jnp.float32)            # (1, D)

    grid_spec = pltpu.PrefetchScalarGridSpec(
        num_scalar_prefetch=1,       # coef -> SMEM
        grid=(nt, E),                # (parallel D_out tiles, expert reduction)
        in_specs=[
            pl.BlockSpec((B, D), lambda n, e, c: (0, 0)),                   # x
            pl.BlockSpec((1, 1, D, tn), lambda n, e, c: (e, n, 0, 0)),      # (W+ab)^T
            pl.BlockSpec((1, 1, A, D, tn), lambda n, e, c: (e, n, 0, 0, 0)),  # adapt W^T
            pl.BlockSpec((1, tn), lambda n, e, c: (0, n)),                  # combined bias
        ],
        out_specs=pl.BlockSpec((B, tn), lambda n, e, c: (0, n)),
        scratch_shapes=[pltpu.VMEM((D, tn), jnp.float32)],                  # W_comb tile
    )

    dsz = jnp.dtype(wdt).itemsize
    cost = pl.CostEstimate(
        flops=2 * E * (A + 1) * D * D + 2 * B * D * D,
        transcendentals=0,
        bytes_accessed=E * (A + 1) * D * D * dsz + B * D * dsz + B * D * 4,
    )

    return pl.pallas_call(
        moe_kernel,
        out_shape=jax.ShapeDtypeStruct((B, D), jnp.float32),
        grid_spec=grid_spec,
        compiler_params=pltpu.CompilerParams(
            dimension_semantics=("parallel", "arbitrary"),
            vmem_limit_bytes=48 * 1024 * 1024),   # above 16/32 MiB scoped defaults,
                                                  # below v7x's 64 MiB physical
        cost_estimate=cost,
    )(coef, x, wT_comb, awT, b_comb)


# --------------------------------------------------------------------------- #
# Pure-JAX reference mirroring the PyTorch forward
# --------------------------------------------------------------------------- #
def moe_reference(x, adapt_input, params):
    base_w, base_b = params["base_w"], params["base_b"]
    adapt_w, adapt_b = params["adapt_w"], params["adapt_b"]
    gate_w, gate_b = params["gate_w"], params["gate_b"]
    E, D, _ = base_w.shape
    gate = jax.nn.softmax(adapt_input @ gate_w.T + gate_b, axis=-1)    # (1, E)
    out = jnp.zeros((x.shape[0], D), jnp.float32)
    for e in range(E):
        wa = (adapt_input @ adapt_w[e].T + adapt_b[e]).reshape(D, D)
        w = base_w[e] + wa
        y = x @ w.T + base_b[e]
        out = out + gate[:, e:e + 1] * y
    return out


if __name__ == "__main__":
    B, D, A, E = 8, 32, 8, 4     # batch, expert_dim, adapt_dim, num_experts
    key = jax.random.PRNGKey(0)
    keys = jax.random.split(key, 8)

    x = jax.random.normal(keys[0], (B, D), jnp.float32)
    adapt_input = jax.random.normal(keys[1], (1, A), jnp.float32)

    params = dict(
        base_w=jax.random.normal(keys[2], (E, D, D), jnp.float32),        # torch.randn
        base_b=jax.random.normal(keys[3], (E, D), jnp.float32),           # torch.randn
        adapt_w=jax.random.normal(keys[4], (E, D * D, A), jnp.float32) * 0.1,
        adapt_b=jax.random.normal(keys[5], (E, D * D), jnp.float32) * 0.1,
        gate_w=jax.random.normal(keys[6], (E, A), jnp.float32) * 0.1,
        gate_b=jax.random.normal(keys[7], (E,), jnp.float32) * 0.1,
    )

    ref = moe_reference(x, adapt_input, params)

    # f32 streamed-weight path: bit-tight correctness check vs the reference.
    prep_f32 = prepare_moe_params(params, weight_dtype=jnp.float32)
    out_f32 = jax.block_until_ready(mixture_of_experts(x, adapt_input, prep_f32))
    assert out_f32.shape == (B, D) and out_f32.dtype == jnp.float32
    err32 = float(jnp.max(jnp.abs(out_f32 - ref)))
    assert jnp.allclose(out_f32, ref, atol=1e-3, rtol=1e-3), err32

    # bf16 streamed-weight path (production default): ~2x less HBM traffic on the
    # bound resource; accumulation stays f32, so the error is bf16 rounding only.
    prep_bf16 = prepare_moe_params(params)                  # weight_dtype=bf16
    out_bf16 = jax.block_until_ready(mixture_of_experts(x, adapt_input, prep_bf16))
    err16 = float(jnp.max(jnp.abs(out_bf16 - ref)))
    assert jnp.allclose(out_bf16, ref, atol=2.5e-1, rtol=2.5e-2), err16

    print("KERNEL_OK")
</pallas_src>

<mosaic_0001>
module attributes {stable_mosaic.version = 11 : i64} {
  func.func @moe_kernel(%arg0: i32, %arg1: i32, %arg2: memref<4x9xf32, #tpu.memory_space<smem>>, %arg3: memref<8x32xf32, #tpu.memory_space<vmem>>, %arg4: memref<1x1x32x32xf32, #tpu.memory_space<vmem>>, %arg5: memref<1x1x8x32x32xf32, #tpu.memory_space<vmem>>, %arg6: memref<1x32xf32, #tpu.memory_space<vmem>>, %arg7: memref<8x32xf32, #tpu.memory_space<vmem>>, %arg8: memref<32x32xf32, #tpu.memory_space<vmem>>) attributes {dimension_semantics = [#tpu.dimension_semantics<parallel>, #tpu.dimension_semantics<arbitrary>], iteration_bounds = array<i64: 1, 4>, scalar_prefetch = 1 : i64, scratch_operands = 1 : i64, tpu.core_type = #tpu.core_type<tc>, window_params = [{pipeline_mode = #tpu.pipeline_mode<synchronous>, transform_indices = @transform_0, window_bounds = array<i64: 8, 32>}, {transform_indices = @transform_1, window_bounds = array<i64: 1, 1, 32, 32>}, {transform_indices = @transform_2, window_bounds = array<i64: 1, 1, 8, 32, 32>}, {transform_indices = @transform_3, window_bounds = array<i64: 1, 32>}, {transform_indices = @transform_4, window_bounds = array<i64: 8, 32>}]} {
    %c0_i32 = arith.constant 0 : i32
    %0 = arith.cmpi eq, %arg1, %c0_i32 : i32
    %1 = arith.extui %0 : i1 to i32
    %c0_i32_0 = arith.constant 0 : i32
    %2 = arith.cmpi ne, %1, %c0_i32_0 : i32
    scf.if %2 {
      %cst = arith.constant 0.000000e+00 : f32
      %71 = vector.broadcast %cst : f32 to vector<32x32xf32>
      %c0_50 = arith.constant 0 : index
      %c0_51 = arith.constant 0 : index
      %72 = vector.load %arg8[%c0_50, %c0_51] : memref<32x32xf32, #tpu.memory_space<vmem>>, vector<32x32xf32>
      tpu.vector_store %arg8[%c0_50, %c0_51], %71 {strides = array<i32>} : memref<32x32xf32, #tpu.memory_space<vmem>>, vector<32x32xf32>,
    } else {
    }
    %3 = arith.index_cast %arg1 : i32 to index
    %c0 = arith.constant 0 : index
    %4 = memref.load %arg2[%3, %c0] : memref<4x9xf32, #tpu.memory_space<smem>>
    %c0_1 = arith.constant 0 : index
    %c0_2 = arith.constant 0 : index
    %c0_3 = arith.constant 0 : index
    %c0_4 = arith.constant 0 : index
    %5 = vector.load %arg4[%c0_1, %c0_2, %c0_3, %c0_4] : memref<1x1x32x32xf32, #tpu.memory_space<vmem>>, vector<1x1x32x32xf32>
    %6 = vector.shape_cast %5 : vector<1x1x32x32xf32> to vector<32x32xf32>
    %7 = vector.broadcast %4 : f32 to vector<32x32xf32>
    %8 = arith.mulf %7, %6 : vector<32x32xf32>
    %9 = arith.index_cast %arg1 : i32 to index
    %c1 = arith.constant 1 : index
    %10 = memref.load %arg2[%9, %c1] : memref<4x9xf32, #tpu.memory_space<smem>>
    %c0_5 = arith.constant 0 : index
    %c0_6 = arith.constant 0 : index
    %c0_7 = arith.constant 0 : index
    %c0_8 = arith.constant 0 : index
    %c0_9 = arith.constant 0 : index
    %11 = vector.load %arg5[%c0_5, %c0_6, %c0_7, %c0_8, %c0_9] : memref<1x1x8x32x32xf32, #tpu.memory_space<vmem>>, vector<1x1x1x32x32xf32>
    %12 = vector.shape_cast %11 : vector<1x1x1x32x32xf32> to vector<32x32xf32>
    %13 = vector.broadcast %10 : f32 to vector<32x32xf32>
    %14 = arith.mulf %13, %12 : vector<32x32xf32>
    %15 = arith.addf %8, %14 : vector<32x32xf32>
    %16 = arith.index_cast %arg1 : i32 to index
    %c2 = arith.constant 2 : index
    %17 = memref.load %arg2[%16, %c2] : memref<4x9xf32, #tpu.memory_space<smem>>
    %c0_10 = arith.constant 0 : index
    %c0_11 = arith.constant 0 : index
    %c1_12 = arith.constant 1 : index
    %c0_13 = arith.constant 0 : index
    %c0_14 = arith.constant 0 : index
    %18 = vector.load %arg5[%c0_10, %c0_11, %c1_12, %c0_13, %c0_14] : memref<1x1x8x32x32xf32, #tpu.memory_space<vmem>>, vector<1x1x1x32x32xf32>
    %19 = vector.shape_cast %18 : vector<1x1x1x32x32xf32> to vector<32x32xf32>
    %20 = vector.broadcast %17 : f32 to vector<32x32xf32>
    %21 = arith.mulf %20, %19 : vector<32x32xf32>
    %22 = arith.addf %15, %21 : vector<32x32xf32>
    %23 = arith.index_cast %arg1 : i32 to index
    %c3 = arith.constant 3 : index
    %24 = memref.load %arg2[%23, %c3] : memref<4x9xf32, #tpu.memory_space<smem>>
    %c0_15 = arith.constant 0 : index
    %c0_16 = arith.constant 0 : index
    %c2_17 = arith.constant 2 : index
    %c0_18 = arith.constant 0 : index
    %c0_19 = arith.constant 0 : index
    %25 = vector.load %arg5[%c0_15, %c0_16, %c2_17, %c0_18, %c0_19] : memref<1x1x8x32x32xf32, #tpu.memory_space<vmem>>, vector<1x1x1x32x32xf32>
    %26 = vector.shape_cast %25 : vector<1x1x1x32x32xf32> to vector<32x32xf32>
    %27 = vector.broadcast %24 : f32 to vector<32x32xf32>
    %28 = arith.mulf %27, %26 : vector<32x32xf32>
    %29 = arith.addf %22, %28 : vector<32x32xf32>
    %30 = arith.index_cast %arg1 : i32 to index
    %c4 = arith.constant 4 : index
    %31 = memref.load %arg2[%30, %c4] : memref<4x9xf32, #tpu.memory_space<smem>>
    %c0_20 = arith.constant 0 : index
    %c0_21 = arith.constant 0 : index
    %c3_22 = arith.constant 3 : index
    %c0_23 = arith.constant 0 : index
    %c0_24 = arith.constant 0 : index
    %32 = vector.load %arg5[%c0_20, %c0_21, %c3_22, %c0_23, %c0_24] : memref<1x1x8x32x32xf32, #tpu.memory_space<vmem>>, vector<1x1x1x32x32xf32>
    %33 = vector.shape_cast %32 : vector<1x1x1x32x32xf32> to vector<32x32xf32>
    %34 = vector.broadcast %31 : f32 to vector<32x32xf32>
    %35 = arith.mulf %34, %33 : vector<32x32xf32>
    %36 = arith.addf %29, %35 : vector<32x32xf32>
    %37 = arith.index_cast %arg1 : i32 to index
    %c5 = arith.constant 5 : index
    %38 = memref.load %arg2[%37, %c5] : memref<4x9xf32, #tpu.memory_space<smem>>
    %c0_25 = arith.constant 0 : index
    %c0_26 = arith.constant 0 : index
    %c4_27 = arith.constant 4 : index
    %c0_28 = arith.constant 0 : index
    %c0_29 = arith.constant 0 : index
    %39 = vector.load %arg5[%c0_25, %c0_26, %c4_27, %c0_28, %c0_29] : memref<1x1x8x32x32xf32, #tpu.memory_space<vmem>>, vector<1x1x1x32x32xf32>
    %40 = vector.shape_cast %39 : vector<1x1x1x32x32xf32> to vector<32x32xf32>
    %41 = vector.broadcast %38 : f32 to vector<32x32xf32>
    %42 = arith.mulf %41, %40 : vector<32x32xf32>
    %43 = arith.addf %36, %42 : vector<32x32xf32>
    %44 = arith.index_cast %arg1 : i32 to index
    %c6 = arith.constant 6 : index
    %45 = memref.load %arg2[%44, %c6] : memref<4x9xf32, #tpu.memory_space<smem>>
    %c0_30 = arith.constant 0 : index
    %c0_31 = arith.constant 0 : index
    %c5_32 = arith.constant 5 : index
    %c0_33 = arith.constant 0 : index
    %c0_34 = arith.constant 0 : index
    %46 = vector.load %arg5[%c0_30, %c0_31, %c5_32, %c0_33, %c0_34] : memref<1x1x8x32x32xf32, #tpu.memory_space<vmem>>, vector<1x1x1x32x32xf32>
    %47 = vector.shape_cast %46 : vector<1x1x1x32x32xf32> to vector<32x32xf32>
    %48 = vector.broadcast %45 : f32 to vector<32x32xf32>
    %49 = arith.mulf %48, %47 : vector<32x32xf32>
    %50 = arith.addf %43, %49 : vector<32x32xf32>
    %51 = arith.index_cast %arg1 : i32 to index
    %c7 = arith.constant 7 : index
    %52 = memref.load %arg2[%51, %c7] : memref<4x9xf32, #tpu.memory_space<smem>>
    %c0_35 = arith.constant 0 : index
    %c0_36 = arith.constant 0 : index
    %c6_37 = arith.constant 6 : index
    %c0_38 = arith.constant 0 : index
    %c0_39 = arith.constant 0 : index
    %53 = vector.load %arg5[%c0_35, %c0_36, %c6_37, %c0_38, %c0_39] : memref<1x1x8x32x32xf32, #tpu.memory_space<vmem>>, vector<1x1x1x32x32xf32>
    %54 = vector.shape_cast %53 : vector<1x1x1x32x32xf32> to vector<32x32xf32>
    %55 = vector.broadcast %52 : f32 to vector<32x32xf32>
    %56 = arith.mulf %55, %54 : vector<32x32xf32>
    %57 = arith.addf %50, %56 : vector<32x32xf32>
    %58 = arith.index_cast %arg1 : i32 to index
    %c8 = arith.constant 8 : index
    %59 = memref.load %arg2[%58, %c8] : memref<4x9xf32, #tpu.memory_space<smem>>
    %c0_40 = arith.constant 0 : index
    %c0_41 = arith.constant 0 : index
    %c7_42 = arith.constant 7 : index
    %c0_43 = arith.constant 0 : index
    %c0_44 = arith.constant 0 : index
    %60 = vector.load %arg5[%c0_40, %c0_41, %c7_42, %c0_43, %c0_44] : memref<1x1x8x32x32xf32, #tpu.memory_space<vmem>>, vector<1x1x1x32x32xf32>
    %61 = vector.shape_cast %60 : vector<1x1x1x32x32xf32> to vector<32x32xf32>
    %62 = vector.broadcast %59 : f32 to vector<32x32xf32>
    %63 = arith.mulf %62, %61 : vector<32x32xf32>
    %64 = arith.addf %57, %63 : vector<32x32xf32>
    %c0_45 = arith.constant 0 : index
    %c0_46 = arith.constant 0 : index
    %65 = vector.load %arg8[%c0_45, %c0_46] : memref<32x32xf32, #tpu.memory_space<vmem>>, vector<32x32xf32>
    %66 = arith.addf %65, %64 : vector<32x32xf32>
    %c0_47 = arith.constant 0 : index
    %c0_48 = arith.constant 0 : index
    %67 = vector.load %arg8[%c0_47, %c0_48] : memref<32x32xf32, #tpu.memory_space<vmem>>, vector<32x32xf32>
    tpu.vector_store %arg8[%c0_47, %c0_48], %66 {strides = array<i32>} : memref<32x32xf32, #tpu.memory_space<vmem>>, vector<32x32xf32>,
    %c3_i32 = arith.constant 3 : i32
    %68 = arith.cmpi eq, %arg1, %c3_i32 : i32
    %69 = arith.extui %68 : i1 to i32
    %c0_i32_49 = arith.constant 0 : i32
    %70 = arith.cmpi ne, %69, %c0_i32_49 : i32
    scf.if %70 {
      %c0_50 = arith.constant 0 : index
      %c0_51 = arith.constant 0 : index
      %71 = vector.load %arg8[%c0_50, %c0_51] : memref<32x32xf32, #tpu.memory_space<vmem>>, vector<32x32xf32>
      %c0_52 = arith.constant 0 : index
      %c0_53 = arith.constant 0 : index
      %72 = vector.load %arg3[%c0_52, %c0_53] : memref<8x32xf32, #tpu.memory_space<vmem>>, vector<8x32xf32>
      %cst = arith.constant dense<0.000000e+00> : vector<8x32xf32>
      %73 = tpu.matmul %72, %71, %cst {dimension_numbers = #tpu.dot_dimension_numbers<[1], [0], [0], [1], [0, 0, 1, 1], [], []>} : vector<8x32xf32>, vector<32x32xf32>, vector<8x32xf32> -> vector<8x32xf32>
      %c0_54 = arith.constant 0 : index
      %c0_55 = arith.constant 0 : index
      %74 = vector.load %arg6[%c0_54, %c0_55] : memref<1x32xf32, #tpu.memory_space<vmem>>, vector<1x32xf32>
      %75 = vector.broadcast %74 : vector<1x32xf32> to vector<8x32xf32>
      %76 = arith.addf %73, %75 : vector<8x32xf32>
      %c0_56 = arith.constant 0 : index
      %c0_57 = arith.constant 0 : index
      %77 = vector.load %arg7[%c0_56, %c0_57] : memref<8x32xf32, #tpu.memory_space<vmem>>, vector<8x32xf32>
      tpu.vector_store %arg7[%c0_56, %c0_57], %76 {strides = array<i32>} : memref<8x32xf32, #tpu.memory_space<vmem>>, vector<8x32xf32>,
    } else {
    }
    return
  }
  func.func @transform_0(%arg0: i32, %arg1: i32, %arg2: memref<4x9xf32, #tpu.memory_space<smem>>) -> (i32, i32) {
    %c0_i32 = arith.constant 0 : i32
    %c0_i32_0 = arith.constant 0 : i32
    %c0_i32_1 = arith.constant 0 : i32
    return %c0_i32, %c0_i32_0 : i32, i32
  }
  func.func @transform_1(%arg0: i32, %arg1: i32, %arg2: memref<4x9xf32, #tpu.memory_space<smem>>) -> (i32, i32, i32, i32) {
    %c0_i32 = arith.constant 0 : i32
    %c0_i32_0 = arith.constant 0 : i32
    %c0_i32_1 = arith.constant 0 : i32
    return %arg1, %arg0, %c0_i32, %c0_i32_0 : i32, i32, i32, i32
  }
  func.func @transform_2(%arg0: i32, %arg1: i32, %arg2: memref<4x9xf32, #tpu.memory_space<smem>>) -> (i32, i32, i32, i32, i32) {
    %c0_i32 = arith.constant 0 : i32
    %c0_i32_0 = arith.constant 0 : i32
    %c0_i32_1 = arith.constant 0 : i32
    %c0_i32_2 = arith.constant 0 : i32
    return %arg1, %arg0, %c0_i32, %c0_i32_0, %c0_i32_1 : i32, i32, i32, i32, i32
  }
  func.func @transform_3(%arg0: i32, %arg1: i32, %arg2: memref<4x9xf32, #tpu.memory_space<smem>>) -> (i32, i32) {
    %c0_i32 = arith.constant 0 : i32
    %c0_i32_0 = arith.constant 0 : i32
    return %c0_i32, %arg0 : i32, i32
  }
  func.func @transform_4(%arg0: i32, %arg1: i32, %arg2: memref<4x9xf32, #tpu.memory_space<smem>>) -> (i32, i32) {
    %c0_i32 = arith.constant 0 : i32
    %c0_i32_0 = arith.constant 0 : i32
    return %c0_i32, %arg0 : i32, i32
  }
}

</mosaic_0001>

<llo_original>
// kernel: tpu_custom_call.1
$region0: #{tpu_custom_call.1}
  #allocation0 [shape = 'u32[]', space=smem, size = 0x4, offset = 0x4, fixed_abs, tag = 'smem constant byte address 0x4 - core index']
  #allocation1 [shape = 'u32[72,128]{1,0:T(1,128)}', space=vmem, size = 0x9000, scoped, tag = 'internal scratch']
  #allocation2 [shape = 'f32[32,32]{1,0:T(8,128)}', space=vmem, size = 0x4000, scoped, tag = 'scratch operand']
  #allocation3 [shape = 's32[1]{0}', space=sflag, size = 0x4, scoped, tag = 'scoped memory for tpu_custom_call.1']
  #allocation4 [shape = 'u8[2048]{0}', space=smem, size = 0x800, scoped, tag = 'prefetched SMEM operand 0']
  %s0 = inlined_call_operand.hbm [shape: f32[4,9], index: 0, kind: input, shape index: {}]
  %s1 = inlined_call_operand.hbm [shape: f32[8,32], index: 1, kind: input, shape index: {}]
  %s2 = inlined_call_operand.hbm [shape: f32[4,1,32,32], index: 2, kind: input, shape index: {}]
  %s3 = inlined_call_operand.hbm [shape: f32[4,1,8,32,32], index: 3, kind: input, shape index: {}]
  %s4 = inlined_call_operand.vmem [shape: f32[1,32], index: 4, kind: input, shape index: {}]
  %s5 = inlined_call_operand.hbm [shape: f32[8,32], index: 5, kind: output, shape index: {}]
  %s6 = sld [smem:[#allocation0]]
  $region69: #{tpu_custom_call.1} parent=0
    _
  %s8 = ssub.s32 1, %s6
  %s9 = scalar_select 0, %s8, %s6
  %s11 = sshll.u32 %s0, 4
  %s12 = int_to_ptr.hbm [resolvable:$true] %s11
  %14 = dma.hbm_to_smem %s12, 64, [#allocation4], [#allocation3]
  %16 = dma.done [#allocation3], 64
  %17 = sfence
  $region1: #{tpu_custom_call.1} parent=0
    #allocation5 [shape = 'u8[4096]{0}', space=vmem, size = 0x1000, scoped, tag = 'input window, operand 1, single buffered']
    #allocation6 [shape = 's32[2]{0}', space=sflag, size = 0x8, scoped, tag = 'scoped memory for tpu_custom_call.1']
    #allocation7 [shape = 's32[2]{0}', space=sflag, size = 0x8, scoped, tag = 'scoped memory for tpu_custom_call.1']
    #allocation8 [shape = 'u8[32768]{0}', space=vmem, size = 0x8000, scoped, tag = 'input window, operand 2']
    #allocation9 [shape = 's32[2]{0}', space=sflag, size = 0x8, scoped, tag = 'scoped memory for tpu_custom_call.1']
    #allocation10 [shape = 'u8[262144]{0}', space=vmem, size = 0x40000, scoped, tag = 'input window, operand 3']
    #allocation11 [shape = 'u8[4096]{0}', space=vmem, size = 0x1000, scoped, tag = 'output window, operand 0, single buffered']
    %18 = vsyncpa [#allocation6], 0
    %19 = vsyncpa [#allocation9], 0
    %s20 = scalar_lea.sflag [#allocation9], 1
    %21 = vsyncpa %s20, 0
    %22 = vsyncpa [#allocation7], 0
    loop: start=0, step=1, limit=6
    $region2: #{tpu_custom_call.1} parent=1 // loop_pre_header
      _
    $region3: #{tpu_custom_call.1} parent=1 // loop_header
      %s24 = sphi 0, %s28
      %p25 = scmp.ge.s32.totalorder %s24, 6
      %s31 = sphi 0, %s43
      %s32 = sphi 0, %s39
      %s33 = sphi 0, %s31
      %s34 = sphi 0, %s32
      %s35 = sphi 0, %s33
      %s36 = sphi 0, %s34
      %s44 = sphi 0, %s44
      %s46 = sphi 0, %s44
      %s47 = sphi 0, %s46
      %s61 = sphi 0, %s47
      %s69 = sphi 0, %s71
      %s72 = sphi 0, %s69
      %s73 = sphi 0, %s72
      %s89 = sphi 0, %s73
      %s97 = sphi 0, %s99
      %s100 = sphi 0, %s97
      %s101 = sphi 0, %s100
      %s117 = sphi 0, %s101
      %s123 = sphi 0, %s125
      %s126 = sphi 0, %s123
      %s127 = sphi 0, %s126
      %s143 = sphi 0, %s127
      %s149 = sphi 0, %s151
      %s152 = sphi 0, %s149
      %s153 = sphi 0, %s152
      %s169 = sphi 0, %s153
    $region4: #{tpu_custom_call.1} parent=1 // loop_header_branch
      %27 = sbr.rel (%p25) target = $region8
    $region5: #{tpu_custom_call.1} parent=1 // loop_body
      %s29 = ssub.s32 %s24, 1
      %s30 = ssub.s32 %s24, 2
      %s37 = sadd.s32 1, %s32
      %p38 = scmp.ge.s32.totalorder %s37, 4
      %s39 = scalar_select %p38, 0, %s37
      %s40 = sadd.s32 1, %s31
      %s41 = scalar_select %p38, %s40, %s31
      %p42 = scmp.ge.s32.totalorder %s41, 1
      %s43 = scalar_select %p42, 0, %s41
      %s45 = sadd.s32 %s44, 1
      %p48 = scmp.eq.s32.totalorder %s24, 3
      %p49 = scmp.ne.s32.totalorder %s44, %s46
      %p50 = scmp.eq.s32.totalorder %s24, 0
      %p51 = por %p49, %p50
      %p52 = scmp.ne.s32.totalorder %s44, %s46
      %p53 = scmp.eq.s32.totalorder %s29, 3
      %p54 = por %p52, %p53
      %p55 = scmp.ne.s32.totalorder %s46, %s47
      %p56 = scmp.eq.s32.totalorder %s29, 0
      %p57 = por %p55, %p56
      %p58 = scmp.ne.s32.totalorder %s46, %s47
      %p59 = scmp.eq.s32.totalorder %s30, 3
      %p60 = por %p58, %p59
      %p62 = scmp.ne.s32.totalorder %s47, %s61
      %p63 = scmp.eq.s32.totalorder %s30, 0
      %p64 = por %p62, %p63
      %s65 = ssub.s32 %s32, %s39
      %s66 = ssub.s32 %s31, %s43
      %s67 = sor.u32 %s65, %s66
      %p68 = scmp.eq.s32.totalorder %s67, 0
      %s70 = sadd.s32 %s69, 1
      %s71 = scalar_select %p68, %s69, %s70
      %p74 = pneg %p68
      %p75 = scmp.eq.s32.totalorder %s24, 3
      %p76 = por %p74, %p75
      %p77 = scmp.ne.s32.totalorder %s69, %s72
      %p78 = scmp.eq.s32.totalorder %s24, 0
      %p79 = por %p77, %p78
      %p80 = scmp.ne.s32.totalorder %s69, %s72
      %p81 = scmp.eq.s32.totalorder %s29, 3
      %p82 = por %p80, %p81
      %p83 = scmp.ne.s32.totalorder %s72, %s73
      %p84 = scmp.eq.s32.totalorder %s29, 0
      %p85 = por %p83, %p84
      %p86 = scmp.ne.s32.totalorder %s72, %s73
      %p87 = scmp.eq.s32.totalorder %s30, 3
      %p88 = por %p86, %p87
      %p90 = scmp.ne.s32.totalorder %s73, %s89
      %p91 = scmp.eq.s32.totalorder %s30, 0
      %p92 = por %p90, %p91
      %s93 = ssub.s32 %s32, %s39
      %s94 = ssub.s32 %s31, %s43
      %s95 = sor.u32 %s93, %s94
      %p96 = scmp.eq.s32.totalorder %s95, 0
      %s98 = sadd.s32 %s97, 1
      %s99 = scalar_select %p96, %s97, %s98
      %p102 = pneg %p96
      %p103 = scmp.eq.s32.totalorder %s24, 3
      %p104 = por %p102, %p103
      %p105 = scmp.ne.s32.totalorder %s97, %s100
      %p106 = scmp.eq.s32.totalorder %s24, 0
      %p107 = por %p105, %p106
      %p108 = scmp.ne.s32.totalorder %s97, %s100
      %p109 = scmp.eq.s32.totalorder %s29, 3
      %p110 = por %p108, %p109
      %p111 = scmp.ne.s32.totalorder %s100, %s101
      %p112 = scmp.eq.s32.totalorder %s29, 0
      %p113 = por %p111, %p112
      %p114 = scmp.ne.s32.totalorder %s100, %s101
      %p115 = scmp.eq.s32.totalorder %s30, 3
      %p116 = por %p114, %p115
      %p118 = scmp.ne.s32.totalorder %s101, %s117
      %p119 = scmp.eq.s32.totalorder %s30, 0
      %p120 = por %p118, %p119
      %s121 = ssub.s32 %s31, %s43
      %p122 = scmp.eq.s32.totalorder %s121, 0
      %s124 = sadd.s32 %s123, 1
      %s125 = scalar_select %p122, %s123, %s124
      %p128 = pneg %p122
      %p129 = scmp.eq.s32.totalorder %s24, 3
      %p130 = por %p128, %p129
      %p131 = scmp.ne.s32.totalorder %s123, %s126
      %p132 = scmp.eq.s32.totalorder %s24, 0
      %p133 = por %p131, %p132
      %p134 = scmp.ne.s32.totalorder %s123, %s126
      %p135 = scmp.eq.s32.totalorder %s29, 3
      %p136 = por %p134, %p135
      %p137 = scmp.ne.s32.totalorder %s126, %s127
      %p138 = scmp.eq.s32.totalorder %s29, 0
      %p139 = por %p137, %p138
      %p140 = scmp.ne.s32.totalorder %s126, %s127
      %p141 = scmp.eq.s32.totalorder %s30, 3
      %p142 = por %p140, %p141
      %p144 = scmp.ne.s32.totalorder %s127, %s143
      %p145 = scmp.eq.s32.totalorder %s30, 0
      %p146 = por %p144, %p145
      %s147 = ssub.s32 %s31, %s43
      %p148 = scmp.eq.s32.totalorder %s147, 0
      %s150 = sadd.s32 %s149, 1
      %s151 = scalar_select %p148, %s149, %s150
      %p154 = pneg %p148
      %p155 = scmp.eq.s32.totalorder %s24, 3
      %p156 = por %p154, %p155
      %p157 = scmp.ne.s32.totalorder %s149, %s152
      %p158 = scmp.eq.s32.totalorder %s24, 0
      %p159 = por %p157, %p158
      %p160 = scmp.ne.s32.totalorder %s149, %s152
      %p161 = scmp.eq.s32.totalorder %s29, 3
      %p162 = por %p160, %p161
      %p163 = scmp.ne.s32.totalorder %s152, %s153
      %p164 = scmp.eq.s32.totalorder %s29, 0
      %p165 = por %p163, %p164
      %p166 = scmp.ne.s32.totalorder %s152, %s153
      %p167 = scmp.eq.s32.totalorder %s30, 3
      %p168 = por %p166, %p167
      %p170 = scmp.ne.s32.totalorder %s153, %s169
      %p171 = scmp.eq.s32.totalorder %s30, 0
      %p172 = por %p170, %p171
      %p173 = scmp.le.s32.totalorder 1, %s24
      %p174 = scmp.lt.s32.totalorder %s24, 5
      %p175 = pnand %p173, %p174
      %p176 = pneg %p175
      // Predicated region
      $region9: #{tpu_custom_call.1} parent=5 // pred_check
        _
      $region10: #{tpu_custom_call.1} parent=5 // pred_check_branch
        %178 = sbr.rel (%p175) target = $region12
      $region11: #{tpu_custom_call.1} parent=5 // pred_region
        %s179 = ssub.s32 %s24, 1
        // Predicated region
        $region13: #{tpu_custom_call.1} parent=11 // pred_check
          %p180 = pneg %p57
        $region14: #{tpu_custom_call.1} parent=11 // pred_check_branch
          %182 = sbr.rel (%p180) target = $region16
        $region15: #{tpu_custom_call.1} parent=11 // pred_region
          %184 = vsyncadd [#allocation6], 0
          %s186 = sshll.u32 %s1, 4
          %s187 = int_to_ptr.hbm [resolvable:$true] %s186
          %s188 = sshll.u32 [#allocation5], 4
          %s189 = int_to_ptr.vmem [resolvable:$true] %s188
          %191 = dma.hbm_to_vmem [thread:$0]  %s187, 128, %s189, [#allocation6]
        $region16: #{tpu_custom_call.1} parent=11 // pred_fallthru
          _
        // Predicated region
        $region17: #{tpu_custom_call.1} parent=11 // pred_check
          %p192 = pneg %p139
        $region18: #{tpu_custom_call.1} parent=11 // pred_check_branch
          %194 = sbr.rel (%p192) target = $region20
        $region19: #{tpu_custom_call.1} parent=11 // pred_region
          %p195 = scmp.lt.s32.totalorder %s33, 0
          %s196 = scalar_select %p195, %s33, 0
          %s197 = scalar_lea.vmem %s4, %s196
        $region20: #{tpu_custom_call.1} parent=11 // pred_fallthru
          _
      $region12: #{tpu_custom_call.1} parent=5 // pred_fallthru
        _
      %p198 = scmp.lt.s32.totalorder %s24, 4
      // Predicated region
      $region21: #{tpu_custom_call.1} parent=5 // pred_check
        %p199 = pneg %p198
      $region22: #{tpu_custom_call.1} parent=5 // pred_check_branch
        %201 = sbr.rel (%p199) target = $region24
      $region23: #{tpu_custom_call.1} parent=5 // pred_region
        // Predicated region
        $region25: #{tpu_custom_call.1} parent=23 // pred_check
          %p202 = pneg %p79
        $region26: #{tpu_custom_call.1} parent=23 // pred_check_branch
          %204 = sbr.rel (%p202) target = $region28
        $region27: #{tpu_custom_call.1} parent=23 // pred_region
          %s205 = sand.u32 %s24, 1
          %s206 = scalar_lea.sflag [#allocation9], %s205
          %s207 = sand.u32 %s69, 1
          %s208 = smul.addr %s207, 32
          %s209 = scalar_lea.vmem [#allocation8], %s208
          %211 = vsyncadd %s206, 0
          %s212 = smul.addr %s31, 4
          %s213 = smul.addr %s32, 4
          %s214 = sadd.s32 %s212, %s213
          %s215 = smul.addr %s214, 8
          %s216 = scalar_lea.hbm %s2, %s215
          %s217 = sshll.u32 %s216, 4
          %s218 = int_to_ptr.hbm [resolvable:$true] %s217
          %s219 = sshll.u32 %s209, 4
          %s220 = int_to_ptr.vmem [resolvable:$true] %s219
          %225 = dma.hbm_to_vmem [thread:$0]  %s218, 512, %s220, %s206, 128, 128, 8
        $region28: #{tpu_custom_call.1} parent=23 // pred_fallthru
          _
        // Predicated region
        $region29: #{tpu_custom_call.1} parent=23 // pred_check
          %p226 = pneg %p107
        $region30: #{tpu_custom_call.1} parent=23 // pred_check_branch
          %228 = sbr.rel (%p226) target = $region32
        $region31: #{tpu_custom_call.1} parent=23 // pred_region
          %s229 = sand.u32 %s24, 1
          %s230 = scalar_lea.sflag [#allocation9], %s229
          %s231 = sand.u32 %s97, 1
          %s232 = smul.addr %s231, 256
          %s233 = scalar_lea.vmem [#allocation10], %s232
          %235 = vsyncadd %s230, 0
          %s236 = smul.addr %s31, 32
          %s237 = smul.addr %s32, 32
          %s238 = sadd.s32 %s236, %s237
          %s239 = smul.addr %s238, 8
          %s240 = scalar_lea.hbm %s3, %s239
          %s241 = sshll.u32 %s240, 4
          %s242 = int_to_ptr.hbm [resolvable:$true] %s241
          %s243 = sshll.u32 %s233, 4
          %s244 = int_to_ptr.vmem [resolvable:$true] %s243
          %249 = dma.hbm_to_vmem [thread:$0]  %s242, 4096, %s244, %s230, 128, 128, 8
        $region32: #{tpu_custom_call.1} parent=23 // pred_fallthru
          _
      $region24: #{tpu_custom_call.1} parent=5 // pred_fallthru
        _
      %p250 = scmp.le.s32.totalorder 1, %s24
      %p251 = scmp.lt.s32.totalorder %s24, 5
      %p252 = pnand %p250, %p251
      %p253 = pneg %p252
      // Predicated region
      $region33: #{tpu_custom_call.1} parent=5 // pred_check
        _
      $region34: #{tpu_custom_call.1} parent=5 // pred_check_branch
        %255 = sbr.rel (%p252) target = $region36
      $region35: #{tpu_custom_call.1} parent=5 // pred_region
        %s256 = ssub.s32 %s24, 1
        // Predicated region
        $region37: #{tpu_custom_call.1} parent=35 // pred_check
          %p257 = pneg %p57
        $region38: #{tpu_custom_call.1} parent=35 // pred_check_branch
          %259 = sbr.rel (%p257) target = $region40
        $region39: #{tpu_custom_call.1} parent=35 // pred_region
          %261 = dma.done [#allocation6], 128
        $region40: #{tpu_custom_call.1} parent=35 // pred_fallthru
          _
        %s262 = sand.u32 %s29, 1
        %s263 = scalar_lea.sflag [#allocation9], %s262
        %s264 = sand.u32 %s72, 1
        %s265 = smul.addr %s264, 32
        %s266 = scalar_lea.vmem [#allocation8], %s265
        // Predicated region
        $region41: #{tpu_custom_call.1} parent=35 // pred_check
          %p267 = pneg %p85
        $region42: #{tpu_custom_call.1} parent=35 // pred_check_branch
          %269 = sbr.rel (%p267) target = $region44
        $region43: #{tpu_custom_call.1} parent=35 // pred_region
          %271 = dma.done %s263, 512
        $region44: #{tpu_custom_call.1} parent=35 // pred_fallthru
          _
        %s272 = sand.u32 %s29, 1
        %s273 = scalar_lea.sflag [#allocation9], %s272
        %s274 = sand.u32 %s100, 1
        %s275 = smul.addr %s274, 256
        %s276 = scalar_lea.vmem [#allocation10], %s275
        // Predicated region
        $region45: #{tpu_custom_call.1} parent=35 // pred_check
          %p277 = pneg %p113
        $region46: #{tpu_custom_call.1} parent=35 // pred_check_branch
          %279 = sbr.rel (%p277) target = $region48
        $region47: #{tpu_custom_call.1} parent=35 // pred_region
          %281 = dma.done %s273, 4096
        $region48: #{tpu_custom_call.1} parent=35 // pred_fallthru
          _
        %p282 = pneg %p57
        %p283 = pneg %p54
        %s284 = sand.u32 %s29, 1
        %s285 = scalar_lea.sflag [#allocation9], %s284
        %s286 = sand.u32 %s72, 1
        %s287 = smul.addr %s286, 32
        %s288 = scalar_lea.vmem [#allocation8], %s287
        %p289 = pneg %p85
        %p290 = pneg %p82
        %s291 = sand.u32 %s29, 1
        %s292 = scalar_lea.sflag [#allocation9], %s291
        %s293 = sand.u32 %s100, 1
        %s294 = smul.addr %s293, 256
        %s295 = scalar_lea.vmem [#allocation10], %s294
        %p296 = pneg %p113
        %p297 = pneg %p110
        %p298 = scmp.lt.s32.totalorder %s33, 0
        %s299 = scalar_select %p298, %s33, 0
        %s300 = scalar_lea.vmem %s4, %s299
        %p301 = pneg %p139
        %p302 = pneg %p136
        %p303 = pneg %p165
        %p304 = pneg %p162
        %p305 = scmp.lt.s32.totalorder %s33, 0
        %s306 = scalar_select %p305, %s33, 0
        %s307 = scalar_lea.vmem %s4, %s306
        %p308 = scmp.eq.s32.totalorder %s34, 0
        // Predicated region
        $region49: #{tpu_custom_call.1} parent=35 // pred_check
          %p309 = pneg %p308
        $region50: #{tpu_custom_call.1} parent=35 // pred_check_branch
          %311 = sbr.rel (%p309) target = $region52
        $region51: #{tpu_custom_call.1} parent=35 // pred_region
          %vm312 = vcmask 261120
          %313 = vst.msk [vmem:[#allocation2] sm:$0xff] %vm312, 0.0
          %314 = vst.msk [vmem:[#allocation2 + $0x8] sm:$0xff] %vm312, 0.0
          %315 = vst.msk [vmem:[#allocation2 + $0x10] sm:$0xff] %vm312, 0.0
          %316 = vst.msk [vmem:[#allocation2 + $0x18] sm:$0xff] %vm312, 0.0
        $region52: #{tpu_custom_call.1} parent=35 // pred_fallthru
          _
        %s317 = smul.u32 %s34, 128
        %s318 = sld [smem:[#allocation4 + %s317]]
        %v319 = vld [vmem:[%s266] sm:$0xff]
        %v320 = vld [vmem:[%s266 + $0x8] sm:$0xff]
        %v321 = vld [vmem:[%s266 + $0x10] sm:$0xff]
        %v322 = vld [vmem:[%s266 + $0x18] sm:$0xff]
        %v323 = vstv %s318
        %v324 = vmul.f32 %v323, %v319
        %v325 = vmul.f32 %v323, %v320
        %v326 = vmul.f32 %v323, %v321
        %v327 = vmul.f32 %v323, %v322
        %s328 = sadd.s32 %s317, 1
        %s329 = sld [smem:[#allocation4 + %s328]]
        %v330 = vld [vmem:[%s276] sm:$0xff]
        %v331 = vld [vmem:[%s276 + $0x8] sm:$0xff]
        %v332 = vld [vmem:[%s276 + $0x10] sm:$0xff]
        %v333 = vld [vmem:[%s276 + $0x18] sm:$0xff]
        %v334 = vstv %s329
        %v335 = vmul.f32 %v334, %v330
        %v336 = vmul.f32 %v334, %v331
        %v337 = vmul.f32 %v334, %v332
        %v338 = vmul.f32 %v334, %v333
        %v339 = vadd.f32 %v324, %v335
        %v340 = vadd.f32 %v325, %v336
        %v341 = vadd.f32 %v326, %v337
        %v342 = vadd.f32 %v327, %v338
        %s343 = sadd.s32 %s317, 2
        %s344 = sld [smem:[#allocation4 + %s343]]
        %s345 = scalar_lea.vmem %s276, 32 [#allocation10]
        %v346 = vld [vmem:[%s345] sm:$0xff]
        %v347 = vld [vmem:[%s345 + $0x8] sm:$0xff]
        %v348 = vld [vmem:[%s345 + $0x10] sm:$0xff]
        %v349 = vld [vmem:[%s345 + $0x18] sm:$0xff]
        %v350 = vstv %s344
        %v351 = vmul.f32 %v350, %v346
        %v352 = vmul.f32 %v350, %v347
        %v353 = vmul.f32 %v350, %v348
        %v354 = vmul.f32 %v350, %v349
        %v355 = vadd.f32 %v339, %v351
        %v356 = vadd.f32 %v340, %v352
        %v357 = vadd.f32 %v341, %v353
        %v358 = vadd.f32 %v342, %v354
        %s359 = sadd.s32 %s317, 3
        %s360 = sld [smem:[#allocation4 + %s359]]
        %s361 = scalar_lea.vmem %s276, 64 [#allocation10]
        %v362 = vld [vmem:[%s361] sm:$0xff]
        %v363 = vld [vmem:[%s361 + $0x8] sm:$0xff]
        %v364 = vld [vmem:[%s361 + $0x10] sm:$0xff]
        %v365 = vld [vmem:[%s361 + $0x18] sm:$0xff]
        %v366 = vstv %s360
        %v367 = vmul.f32 %v366, %v362
        %v368 = vmul.f32 %v366, %v363
        %v369 = vmul.f32 %v366, %v364
        %v370 = vmul.f32 %v366, %v365
        %v371 = vadd.f32 %v355, %v367
        %v372 = vadd.f32 %v356, %v368
        %v373 = vadd.f32 %v357, %v369
        %v374 = vadd.f32 %v358, %v370
        %s375 = sadd.s32 %s317, 4
        %s376 = sld [smem:[#allocation4 + %s375]]
        %s377 = scalar_lea.vmem %s276, 96 [#allocation10]
        %v378 = vld [vmem:[%s377] sm:$0xff]
        %v379 = vld [vmem:[%s377 + $0x8] sm:$0xff]
        %v380 = vld [vmem:[%s377 + $0x10] sm:$0xff]
        %v381 = vld [vmem:[%s377 + $0x18] sm:$0xff]
        %v382 = vstv %s376
        %v383 = vmul.f32 %v382, %v378
        %v384 = vmul.f32 %v382, %v379
        %v385 = vmul.f32 %v382, %v380
        %v386 = vmul.f32 %v382, %v381
        %v387 = vadd.f32 %v371, %v383
        %v388 = vadd.f32 %v372, %v384
        %v389 = vadd.f32 %v373, %v385
        %v390 = vadd.f32 %v374, %v386
        %s391 = sadd.s32 %s317, 5
        %s392 = sld [smem:[#allocation4 + %s391]]
        %s393 = scalar_lea.vmem %s276, 128 [#allocation10]
        %v394 = vld [vmem:[%s393] sm:$0xff]
        %v395 = vld [vmem:[%s393 + $0x8] sm:$0xff]
        %v396 = vld [vmem:[%s393 + $0x10] sm:$0xff]
        %v397 = vld [vmem:[%s393 + $0x18] sm:$0xff]
        %v398 = vstv %s392
        %v399 = vmul.f32 %v398, %v394
        %v400 = vmul.f32 %v398, %v395
        %v401 = vmul.f32 %v398, %v396
        %v402 = vmul.f32 %v398, %v397
        %v403 = vadd.f32 %v387, %v399
        %v404 = vadd.f32 %v388, %v400
        %v405 = vadd.f32 %v389, %v401
        %v406 = vadd.f32 %v390, %v402
        %s407 = sadd.s32 %s317, 6
        %s408 = sld [smem:[#allocation4 + %s407]]
        %s409 = scalar_lea.vmem %s276, 160 [#allocation10]
        %v410 = vld [vmem:[%s409] sm:$0xff]
        %v411 = vld [vmem:[%s409 + $0x8] sm:$0xff]
        %v412 = vld [vmem:[%s409 + $0x10] sm:$0xff]
        %v413 = vld [vmem:[%s409 + $0x18] sm:$0xff]
        %v414 = vstv %s408
        %v415 = vmul.f32 %v414, %v410
        %v416 = vmul.f32 %v414, %v411
        %v417 = vmul.f32 %v414, %v412
        %v418 = vmul.f32 %v414, %v413
        %v419 = vadd.f32 %v403, %v415
        %v420 = vadd.f32 %v404, %v416
        %v421 = vadd.f32 %v405, %v417
        %v422 = vadd.f32 %v406, %v418
        %s423 = sadd.s32 %s317, 7
        %s424 = sld [smem:[#allocation4 + %s423]]
        %s425 = scalar_lea.vmem %s276, 192 [#allocation10]
        %v426 = vld [vmem:[%s425] sm:$0xff]
        %v427 = vld [vmem:[%s425 + $0x8] sm:$0xff]
        %v428 = vld [vmem:[%s425 + $0x10] sm:$0xff]
        %v429 = vld [vmem:[%s425 + $0x18] sm:$0xff]
        %v430 = vstv %s424
        %v431 = vmul.f32 %v430, %v426
        %v432 = vmul.f32 %v430, %v427
        %v433 = vmul.f32 %v430, %v428
        %v434 = vmul.f32 %v430, %v429
        %v435 = vadd.f32 %v419, %v431
        %v436 = vadd.f32 %v420, %v432
        %v437 = vadd.f32 %v421, %v433
        %v438 = vadd.f32 %v422, %v434
        %s439 = sadd.s32 %s317, 8
        %s440 = sld [smem:[#allocation4 + %s439]]
        %s441 = scalar_lea.vmem %s276, 224 [#allocation10]
        %v442 = vld [vmem:[%s441] sm:$0xff]
        %v443 = vld [vmem:[%s441 + $0x8] sm:$0xff]
        %v444 = vld [vmem:[%s441 + $0x10] sm:$0xff]
        %v445 = vld [vmem:[%s441 + $0x18] sm:$0xff]
        %v446 = vstv %s440
        %v447 = vmul.f32 %v446, %v442
        %v448 = vmul.f32 %v446, %v443
        %v449 = vmul.f32 %v446, %v444
        %v450 = vmul.f32 %v446, %v445
        %v451 = vadd.f32 %v435, %v447
        %v452 = vadd.f32 %v436, %v448
        %v453 = vadd.f32 %v437, %v449
        %v454 = vadd.f32 %v438, %v450
        %v455 = vld [vmem:[#allocation2] sm:$0xff]
        %v456 = vld [vmem:[#allocation2 + $0x8] sm:$0xff]
        %v457 = vld [vmem:[#allocation2 + $0x10] sm:$0xff]
        %v458 = vld [vmem:[#allocation2 + $0x18] sm:$0xff]
        %v459 = vadd.f32 %v455, %v451
        %v460 = vadd.f32 %v456, %v452
        %v461 = vadd.f32 %v457, %v453
        %v462 = vadd.f32 %v458, %v454
        %vm463 = vcmask 261120
        %464 = vst.msk [vmem:[#allocation2] sm:$0xff] %vm463, %v459
        %465 = vst.msk [vmem:[#allocation2 + $0x8] sm:$0xff] %vm463, %v460
        %466 = vst.msk [vmem:[#allocation2 + $0x10] sm:$0xff] %vm463, %v461
        %467 = vst.msk [vmem:[#allocation2 + $0x18] sm:$0xff] %vm463, %v462
        %p468 = scmp.eq.s32.totalorder %s34, 3
        // Predicated region
        $region53: #{tpu_custom_call.1} parent=35 // pred_check
          %p469 = pneg %p468
        $region54: #{tpu_custom_call.1} parent=35 // pred_check_branch
          %471 = sbr.rel (%p469) target = $region56
        $region55: #{tpu_custom_call.1} parent=35 // pred_region
          %v472 = vld [vmem:[#allocation2] sm:$0xff]
          %v473 = vld [vmem:[#allocation2 + $0x8] sm:$0xff]
          %v474 = vld [vmem:[#allocation2 + $0x10] sm:$0xff]
          %v475 = vld [vmem:[#allocation2 + $0x18] sm:$0xff]
          %v476 = vld [vmem:[#allocation5] sm:$0xff]
          %v477 = vld [vmem:[%s307] sm:$0x1]
          %v479 = vperm.slane %v477, 0
          %v482 = vsel %vm463, %v476, 0
          %484 = vmatpush.msra.mxu0 0.0
          %485 = vmatpush.msra.mxu0 0.0
          %486 = vmatpush.msra.mxu0 0.0
          %487 = vmatpush.msra.mxu0 0.0
          %488 = vmatpush.msra.mxu0 0.0
          %489 = vmatpush.msra.mxu0 0.0
          %490 = vmatpush.msra.mxu0 0.0
          %491 = vmatpush.msra.mxu0 0.0
          %492 = vmatpush.msra.mxu0 0.0
          %493 = vmatpush.msra.mxu0 0.0
          %494 = vmatpush.msra.mxu0 0.0
          %495 = vmatpush.msra.mxu0 0.0
          %496 = vmatpush.msra.mxu0 %v475
          %497 = vmatpush.msra.mxu0 %v474
          %498 = vmatpush.msra.mxu0 %v473
          %499 = vmatpush.msra.mxu0 %v472
          %500 = vmatmul.f32.gmra.mxu0 %v482
          %v501 = vpop.f32.mrf.mxu0
          %v502 = vadd.f32 %v479, %v501
          %503 = vdwg.mxu0
          %504 = vst.msk [vmem:[#allocation11] sm:$0xff] %vm463, %v502
        $region56: #{tpu_custom_call.1} parent=35 // pred_fallthru
          _
        // Predicated region
        $region57: #{tpu_custom_call.1} parent=35 // pred_check
          %p505 = pneg %p162
        $region58: #{tpu_custom_call.1} parent=35 // pred_check_branch
          %507 = sbr.rel (%p505) target = $region60
        $region59: #{tpu_custom_call.1} parent=35 // pred_region
          %509 = vsyncadd [#allocation7], 0
          %s510 = smul.addr %s33, 8
          %s511 = scalar_lea.hbm %s5, %s510
          %s513 = sshll.u32 [#allocation11], 4
          %s514 = int_to_ptr.vmem [resolvable:$true] %s513
          %s515 = sshll.u32 %s511, 4
          %s516 = int_to_ptr.hbm [resolvable:$true] %s515
          %518 = dma.vmem_to_hbm [thread:$0]  %s514, 128, %s516, [#allocation7]
        $region60: #{tpu_custom_call.1} parent=35 // pred_fallthru
          _
        // Predicated region
        $region61: #{tpu_custom_call.1} parent=35 // pred_check
          %p519 = pneg %p162
        $region62: #{tpu_custom_call.1} parent=35 // pred_check_branch
          %521 = sbr.rel (%p519) target = $region64
        $region63: #{tpu_custom_call.1} parent=35 // pred_region
          %523 = dma.done [#allocation7], 128
        $region64: #{tpu_custom_call.1} parent=35 // pred_fallthru
          _
      $region36: #{tpu_custom_call.1} parent=5 // pred_fallthru
        _
      %p524 = scmp.le.s32.totalorder 2, %s24
      // Predicated region
      $region65: #{tpu_custom_call.1} parent=5 // pred_check
        %p525 = pneg %p524
      $region66: #{tpu_custom_call.1} parent=5 // pred_check_branch
        %527 = sbr.rel (%p525) target = $region68
      $region67: #{tpu_custom_call.1} parent=5 // pred_region
        %s528 = ssub.s32 %s24, 2
      $region68: #{tpu_custom_call.1} parent=5 // pred_fallthru
        _
    $region6: #{tpu_custom_call.1} parent=1 // loop_footer
      %s28 = sadd.s32 1, %s24
    $region7: #{tpu_custom_call.1} parent=1 // loop_footer_branch
      %23 = sbr.rel target = $region3
    $region8: #{tpu_custom_call.1} parent=1 // loop_exit
      _
    %529 = vsyncpa [#allocation6], 1
    %s530 = scalar_lea.sflag [#allocation6], 1
    %531 = vsyncpa %s530, 1
    %532 = vsyncpa [#allocation9], 1
    %s533 = scalar_lea.sflag [#allocation9], 1
    %534 = vsyncpa %s533, 1
    %535 = vsyncpa [#allocation7], 1
    %s536 = scalar_lea.sflag [#allocation7], 1
    %537 = vsyncpa %s536, 1

</llo_original>
